<compile_context>
chip_gen: v6e
topology: v6e:2x2x1
jax: 0.10.0
libtpu: 0.0.40
codegen_flags: <defaults>
</compile_context>

<pallas_src>
import math

import jax
import jax.numpy as jnp
from jax.experimental import pallas as pl
from jax.experimental.pallas import tpu as pltpu

HID_SIZE = 64

LANE = 128   # TPU lane width (last dim of a vreg)
SUB = 8      # f32 sublane count

# Row layout of the packed parameter slab ([_SLAB_ROWS, 128]):
#   rows   0:128  -> W1 (zero-padded [obs, HID]   -> [128, 128]; only first obs rows used)
#   rows 128:256  -> W2 (zero-padded [HID, HID]   -> [128, 128])
#   rows 256:384  -> W3 (zero-padded [HID, act]   -> [128, 128])
#   rows 384:400  -> b1 on row 384 (rest zero)
#   rows 400:416  -> b2 on row 400 (rest zero)
#   rows 416:432  -> b3 on row 416 (rest zero)
# All offsets are multiples of 16 so static slices stay tile-aligned for both
# f32 (8-row tiles) and bf16 (16-row tiles) slabs.
_W1_OFF, _W2_OFF, _W3_OFF = 0, 128, 256
_B1_OFF, _B2_OFF, _B3_OFF = 384, 400, 416
_BIAS_ROWS = 16
_SLAB_ROWS = 432


def _round_up(v, m):
    return ((v + m - 1) // m) * m


def _make_actor_kernel(obs_size, act_size):
    """Build the fused MLP kernel for static (obs_size, act_size)."""

    def kernel(x_ref, slab_ref, o_ref):
        x = x_ref[...]                                          # [TB, obs]
        w1 = slab_ref[_W1_OFF:_W1_OFF + obs_size, :]            # [obs, 128]
        w2 = slab_ref[_W2_OFF:_W2_OFF + LANE, :]                # [128, 128]
        w3 = slab_ref[_W3_OFF:_W3_OFF + LANE, :]                # [128, 128]
        b1 = slab_ref[_B1_OFF:_B1_OFF + 1, :].astype(jnp.float32)   # [1, 128]
        b2 = slab_ref[_B2_OFF:_B2_OFF + 1, :].astype(jnp.float32)
        b3 = slab_ref[_B3_OFF:_B3_OFF + 1, :].astype(jnp.float32)

        # Zero-padding invariant: padded lanes of h1/h2 are tanh(0) = 0, so
        # they never contaminate the valid lanes of later layers.
        h1 = jnp.tanh(jnp.dot(x, w1, preferred_element_type=jnp.float32) + b1)
        h2 = jnp.tanh(
            jnp.dot(h1.astype(w2.dtype), w2,
                    preferred_element_type=jnp.float32) + b2)
        out = jnp.tanh(
            jnp.dot(h2.astype(w3.dtype), w3,
                    preferred_element_type=jnp.float32) + b3)   # [TB, 128]
        o_ref[...] = out[:, :act_size].astype(o_ref.dtype)      # narrow store

    return kernel


def pack_params(params, dtype=jnp.float32):
    """Pack (w1,b1,w2,b2,w3,b3) into one lane-padded [432,128] slab.

    dtype=jnp.bfloat16 enables narrow transport (matmul stays f32-accumulated).
    """
    w1, b1, w2, b2, w3, b3 = params

    def pad_w(w):
        buf = jnp.zeros((LANE, LANE), jnp.float32)
        return buf.at[: w.shape[0], : w.shape[1]].set(w.astype(jnp.float32))

    def pad_b(b):
        buf = jnp.zeros((_BIAS_ROWS, LANE), jnp.float32)
        return buf.at[0, : b.shape[-1]].set(b.reshape(-1).astype(jnp.float32))

    slab = jnp.concatenate(
        [pad_w(w1), pad_w(w2), pad_w(w3), pad_b(b1), pad_b(b2), pad_b(b3)],
        axis=0,
    ).astype(dtype)
    assert slab.shape == (_SLAB_ROWS, LANE)
    return slab


def model_actor_forward(x, slab, act_size, *, batch_tile=2048):
    """Fused forward of ModelActor.mu.

    x:    [B, obs_size] float32
    slab: packed params from pack_params(), [432, 128] (f32 or bf16 transport)
    Returns [B, act_size] float32.
    """
    B, obs = x.shape
    assert obs <= LANE and HID_SIZE <= LANE and act_size <= LANE
    assert slab.shape == (_SLAB_ROWS, LANE)

    dtype = slab.dtype
    kernel = _make_actor_kernel(obs, act_size)

    # Pad batch to a multiple of 8 sublanes; for the tiled path choose the tile
    # adaptively so padding stays small and the grid is even (>=2) for the
    # v7x dual-TensorCore "parallel" split.
    B_pad = max(SUB, _round_up(B, SUB))
    tiled = B_pad > batch_tile
    if tiled:
        nb = pl.cdiv(B_pad, batch_tile)
        if nb % 2:
            nb += 1
        tile = _round_up(pl.cdiv(B_pad, nb), SUB)
        B_pad = tile * nb

    xk = x.astype(dtype)
    if B_pad != B:
        xk = jnp.zeros((B_pad, obs), dtype).at[:B].set(xk)

    itemsize = jnp.dtype(dtype).itemsize
    cost = pl.CostEstimate(
        flops=2 * B_pad * (obs * HID_SIZE + HID_SIZE * HID_SIZE
                           + HID_SIZE * act_size),
        transcendentals=B_pad * (2 * HID_SIZE + act_size),
        bytes_accessed=(B_pad * obs * itemsize
                        + _SLAB_ROWS * LANE * itemsize
                        + B_pad * act_size * 4),
    )

    if not tiled:
        # Single shot: full-extent VMEM blocks, no per-step grid overhead.
        out = pl.pallas_call(
            kernel,
            out_shape=jax.ShapeDtypeStruct((B_pad, act_size), jnp.float32),
            grid=(),
            in_specs=[
                pl.BlockSpec((B_pad, obs), lambda: (0, 0)),
                pl.BlockSpec((_SLAB_ROWS, LANE), lambda: (0, 0)),
            ],
            out_specs=pl.BlockSpec((B_pad, act_size), lambda: (0, 0)),
            cost_estimate=cost,
        )(xk, slab)
    else:
        # Batch-tiled: x/out tiles double-buffer, weights stay resident;
        # "parallel" lets the two TensorCores on v7x split the (even) grid.
        out = pl.pallas_call(
            kernel,
            out_shape=jax.ShapeDtypeStruct((B_pad, act_size), jnp.float32),
            grid=(nb,),
            in_specs=[
                pl.BlockSpec((tile, obs), lambda i: (i, 0)),
                pl.BlockSpec((_SLAB_ROWS, LANE), lambda i: (0, 0)),
            ],
            out_specs=pl.BlockSpec((tile, act_size), lambda i: (i, 0)),
            compiler_params=pltpu.CompilerParams(
                dimension_semantics=("parallel",)
            ),
            cost_estimate=cost,
        )(xk, slab)

    return out[:B] if B_pad != B else out


def init_params(key, obs_size, act_size):
    """Deterministic init mimicking PyTorch nn.Linear default (uniform +-1/sqrt(fan_in)).

    Weights are [in, out] so the kernel computes x @ W + b (equivalent to
    PyTorch x @ W.T with W: [out, in]).  `logstd` is a parameter only; it is
    not used in forward().
    """
    dims = [(obs_size, HID_SIZE), (HID_SIZE, HID_SIZE), (HID_SIZE, act_size)]
    params = []
    for fan_in, fan_out in dims:
        kw, kb, key = jax.random.split(key, 3)
        bound = 1.0 / math.sqrt(fan_in)
        w = jax.random.uniform(kw, (fan_in, fan_out), jnp.float32, -bound, bound)
        b = jax.random.uniform(kb, (1, fan_out), jnp.float32, -bound, bound)
        params.extend([w, b])
    logstd = jnp.zeros((act_size,), jnp.float32)  # unused in forward
    return tuple(params), logstd


def reference_forward(x, params):
    w1, b1, w2, b2, w3, b3 = params
    h = jnp.tanh(x @ w1 + b1)
    h = jnp.tanh(h @ w2 + b2)
    return jnp.tanh(h @ w3 + b3)


if __name__ == "__main__":
    key = jax.random.PRNGKey(0)
    obs_size, act_size, batch = 16, 4, 8

    k_x, k_p, k_x2 = jax.random.split(key, 3)
    x = jax.random.normal(k_x, (batch, obs_size), jnp.float32)
    params, logstd = init_params(k_p, obs_size, act_size)
    slab = pack_params(params)  # f32 transport (bit-faithful to the module)

    # Small batch: grid=() fast path.
    out = jax.block_until_ready(model_actor_forward(x, slab, act_size))
    ref = reference_forward(x, params)
    assert out.shape == (batch, act_size)
    assert jnp.allclose(out, ref, atol=1e-5, rtol=1e-5), "mismatch vs JAX reference"

    # Larger batch: exercise the batch-tiled ("parallel") path.
    big_b = 300
    x2 = jax.random.normal(k_x2, (big_b, obs_size), jnp.float32)
    out2 = jax.block_until_ready(
        model_actor_forward(x2, slab, act_size, batch_tile=128)
    )
    ref2 = reference_forward(x2, params)
    assert out2.shape == (big_b, act_size)
    assert jnp.allclose(out2, ref2, atol=1e-5, rtol=1e-5), "tiled-path mismatch"

    # Optional bf16 transport (halves HBM traffic on v6e/v7x); looser tolerance.
    slab_bf16 = pack_params(params, dtype=jnp.bfloat16)
    out3 = jax.block_until_ready(
        model_actor_forward(x2, slab_bf16, act_size, batch_tile=128)
    )
    assert out3.shape == (big_b, act_size)
    assert jnp.allclose(out3, ref2, atol=5e-2, rtol=5e-2), "bf16-transport mismatch"

    print("KERNEL_OK")
</pallas_src>

<mosaic_0001>
module attributes {stable_mosaic.version = 11 : i64} {
  func.func @kernel(%arg0: memref<8x16xf32, #tpu.memory_space<vmem>>, %arg1: memref<432x128xf32, #tpu.memory_space<vmem>>, %arg2: memref<8x4xf32, #tpu.memory_space<vmem>>) attributes {dimension_semantics = [], scalar_prefetch = 0 : i64, scratch_operands = 0 : i64, tpu.core_type = #tpu.core_type<tc>} {
    %c0 = arith.constant 0 : index
    %c0_0 = arith.constant 0 : index
    %0 = vector.load %arg0[%c0, %c0_0] : memref<8x16xf32, #tpu.memory_space<vmem>>, vector<8x16xf32>
    %c0_1 = arith.constant 0 : index
    %c0_2 = arith.constant 0 : index
    %1 = vector.load %arg1[%c0_1, %c0_2] : memref<432x128xf32, #tpu.memory_space<vmem>>, vector<16x128xf32>
    %c128 = arith.constant 128 : index
    %c0_3 = arith.constant 0 : index
    %2 = vector.load %arg1[%c128, %c0_3] : memref<432x128xf32, #tpu.memory_space<vmem>>, vector<128x128xf32>
    %c256 = arith.constant 256 : index
    %c0_4 = arith.constant 0 : index
    %3 = vector.load %arg1[%c256, %c0_4] : memref<432x128xf32, #tpu.memory_space<vmem>>, vector<128x128xf32>
    %c384 = arith.constant 384 : index
    %c0_5 = arith.constant 0 : index
    %4 = vector.load %arg1[%c384, %c0_5] : memref<432x128xf32, #tpu.memory_space<vmem>>, vector<1x128xf32>
    %c400 = arith.constant 400 : index
    %c0_6 = arith.constant 0 : index
    %5 = vector.load %arg1[%c400, %c0_6] : memref<432x128xf32, #tpu.memory_space<vmem>>, vector<1x128xf32>
    %c416 = arith.constant 416 : index
    %c0_7 = arith.constant 0 : index
    %6 = vector.load %arg1[%c416, %c0_7] : memref<432x128xf32, #tpu.memory_space<vmem>>, vector<1x128xf32>
    %cst = arith.constant dense<0.000000e+00> : vector<8x128xf32>
    %7 = tpu.matmul %0, %1, %cst {dimension_numbers = #tpu.dot_dimension_numbers<[1], [0], [0], [1], [0, 0, 1, 1], [], []>} : vector<8x16xf32>, vector<16x128xf32>, vector<8x128xf32> -> vector<8x128xf32>
    %8 = vector.broadcast %4 : vector<1x128xf32> to vector<8x128xf32>
    %9 = arith.addf %7, %8 : vector<8x128xf32>
    %10 = math.tanh %9 : vector<8x128xf32>
    %cst_8 = arith.constant dense<0.000000e+00> : vector<8x128xf32>
    %11 = tpu.matmul %10, %2, %cst_8 {dimension_numbers = #tpu.dot_dimension_numbers<[1], [0], [0], [1], [0, 0, 1, 1], [], []>} : vector<8x128xf32>, vector<128x128xf32>, vector<8x128xf32> -> vector<8x128xf32>
    %12 = vector.broadcast %5 : vector<1x128xf32> to vector<8x128xf32>
    %13 = arith.addf %11, %12 : vector<8x128xf32>
    %14 = math.tanh %13 : vector<8x128xf32>
    %cst_9 = arith.constant dense<0.000000e+00> : vector<8x128xf32>
    %15 = tpu.matmul %14, %3, %cst_9 {dimension_numbers = #tpu.dot_dimension_numbers<[1], [0], [0], [1], [0, 0, 1, 1], [], []>} : vector<8x128xf32>, vector<128x128xf32>, vector<8x128xf32> -> vector<8x128xf32>
    %16 = vector.broadcast %6 : vector<1x128xf32> to vector<8x128xf32>
    %17 = arith.addf %15, %16 : vector<8x128xf32>
    %18 = math.tanh %17 : vector<8x128xf32>
    %19 = vector.extract_strided_slice %18 {offsets = [0, 0], sizes = [8, 4], strides = [1, 1]} : vector<8x128xf32> to vector<8x4xf32>
    %c0_10 = arith.constant 0 : index
    %c0_11 = arith.constant 0 : index
    %20 = vector.load %arg2[%c0_10, %c0_11] : memref<8x4xf32, #tpu.memory_space<vmem>>, vector<8x4xf32>
    tpu.vector_store %arg2[%c0_10, %c0_11], %19 {strides = array<i32>} : memref<8x4xf32, #tpu.memory_space<vmem>>, vector<8x4xf32>,
    return
  }
}

</mosaic_0001>

<llo_original>
// kernel: tpu_custom_call.1
$region0: #{tpu_custom_call.1}
  #allocation0 [shape = 'u32[]', space=smem, size = 0x4, offset = 0x4, fixed_abs, tag = 'smem constant byte address 0x4 - core index']
  #allocation1 [shape = 'u32[144,128]{1,0:T(1,128)}', space=vmem, size = 0x12000, scoped, tag = 'internal scratch']
  %s0 = inlined_call_operand.hbm [shape: f32[8,16], index: 0, kind: input, shape index: {}]
  %s1 = inlined_call_operand.hbm [shape: f32[432,128], index: 1, kind: input, shape index: {}]
  %s2 = inlined_call_operand.vmem [shape: f32[8,4], index: 2, kind: output, shape index: {}]
  %s3 = sld [smem:[#allocation0]]
  $region26: #{tpu_custom_call.1} parent=0
    _
  %s5 = ssub.s32 1, %s3
  %s6 = scalar_select 0, %s5, %s3
  $region1: #{tpu_custom_call.1} parent=0
    #allocation2 [shape = 'u8[4096]{0}', space=vmem, size = 0x1000, scoped, tag = 'input window, operand 0, single buffered']
    #allocation3 [shape = 's32[1]{0}', space=sflag, size = 0x4, scoped, tag = 'scoped memory for tpu_custom_call.1']
    #allocation4 [shape = 'u8[221184]{0}', space=vmem, size = 0x36000, scoped, tag = 'input window, operand 1, single buffered']
    #allocation5 [shape = 's32[1]{0}', space=sflag, size = 0x4, scoped, tag = 'scoped memory for tpu_custom_call.1']
    %7 = vsyncpa [#allocation3], 0
    %8 = vsyncpa [#allocation5], 0
    // Predicated region
    $region2: #{tpu_custom_call.1} parent=1 // pred_check
      _
    $region3: #{tpu_custom_call.1} parent=1 // pred_check_branch
      %10 = sbr.rel (0) target = $region5
    $region4: #{tpu_custom_call.1} parent=1 // pred_region
      %s12 = ssub.s32 128, 128
      %13 = vsyncadd [#allocation3], %s12
      %s15 = sshll.u32 [#allocation2], 4
      %s16 = int_to_ptr.vmem [resolvable:$true] %s15
      %18 = dma.hbm_to_vmem [thread:$0]  %s0, 128, %s16, [#allocation3]
    $region5: #{tpu_custom_call.1} parent=1 // pred_fallthru
      _
    // Predicated region
    $region6: #{tpu_custom_call.1} parent=1 // pred_check
      _
    $region7: #{tpu_custom_call.1} parent=1 // pred_check_branch
      %20 = sbr.rel (0) target = $region9
    $region8: #{tpu_custom_call.1} parent=1 // pred_region
      %s22 = ssub.s32 6912, 6912
      %23 = vsyncadd [#allocation5], %s22
      %s24 = sshll.u32 [#allocation4], 4
      %s25 = int_to_ptr.vmem [resolvable:$true] %s24
      %30 = dma.hbm_to_vmem [thread:$0]  %s1, 6912, %s25, [#allocation5], 128, 128, 8
    $region9: #{tpu_custom_call.1} parent=1 // pred_fallthru
      _
    // Predicated region
    $region10: #{tpu_custom_call.1} parent=1 // pred_check
      _
    $region11: #{tpu_custom_call.1} parent=1 // pred_check_branch
      %32 = sbr.rel (0) target = $region13
    $region12: #{tpu_custom_call.1} parent=1 // pred_region
      %33 = dma.done [#allocation3], 128
    $region13: #{tpu_custom_call.1} parent=1 // pred_fallthru
      _
    // Predicated region
    $region14: #{tpu_custom_call.1} parent=1 // pred_check
      _
    $region15: #{tpu_custom_call.1} parent=1 // pred_check_branch
      %35 = sbr.rel (0) target = $region17
    $region16: #{tpu_custom_call.1} parent=1 // pred_region
      %36 = dma.done [#allocation5], 6912
    $region17: #{tpu_custom_call.1} parent=1 // pred_fallthru
      _
    %v37 = vld [vmem:[#allocation2] sm:$0xff]
    %v38 = vld [vmem:[#allocation4] sm:$0xff]
    %v39 = vld [vmem:[#allocation4 + $0x8] sm:$0xff]
    %v40 = vld [vmem:[#allocation4 + $0x80] sm:$0xff]
    %v41 = vld [vmem:[#allocation4 + $0x88] sm:$0xff]
    %v42 = vld [vmem:[#allocation4 + $0x90] sm:$0xff]
    %v43 = vld [vmem:[#allocation4 + $0x98] sm:$0xff]
    %v44 = vld [vmem:[#allocation4 + $0xa0] sm:$0xff]
    %v45 = vld [vmem:[#allocation4 + $0xa8] sm:$0xff]
    %v46 = vld [vmem:[#allocation4 + $0xb0] sm:$0xff]
    %v47 = vld [vmem:[#allocation4 + $0xb8] sm:$0xff]
    %v48 = vld [vmem:[#allocation4 + $0xc0] sm:$0xff]
    %v49 = vld [vmem:[#allocation4 + $0xc8] sm:$0xff]
    %v50 = vld [vmem:[#allocation4 + $0xd0] sm:$0xff]
    %v51 = vld [vmem:[#allocation4 + $0xd8] sm:$0xff]
    %v52 = vld [vmem:[#allocation4 + $0xe0] sm:$0xff]
    %v53 = vld [vmem:[#allocation4 + $0xe8] sm:$0xff]
    %v54 = vld [vmem:[#allocation4 + $0xf0] sm:$0xff]
    %v55 = vld [vmem:[#allocation4 + $0xf8] sm:$0xff]
    %v56 = vld [vmem:[#allocation4 + $0x100] sm:$0xff]
    %v57 = vld [vmem:[#allocation4 + $0x108] sm:$0xff]
    %v58 = vld [vmem:[#allocation4 + $0x110] sm:$0xff]
    %v59 = vld [vmem:[#allocation4 + $0x118] sm:$0xff]
    %v60 = vld [vmem:[#allocation4 + $0x120] sm:$0xff]
    %v61 = vld [vmem:[#allocation4 + $0x128] sm:$0xff]
    %v62 = vld [vmem:[#allocation4 + $0x130] sm:$0xff]
    %v63 = vld [vmem:[#allocation4 + $0x138] sm:$0xff]
    %v64 = vld [vmem:[#allocation4 + $0x140] sm:$0xff]
    %v65 = vld [vmem:[#allocation4 + $0x148] sm:$0xff]
    %v66 = vld [vmem:[#allocation4 + $0x150] sm:$0xff]
    %v67 = vld [vmem:[#allocation4 + $0x158] sm:$0xff]
    %v68 = vld [vmem:[#allocation4 + $0x160] sm:$0xff]
    %v69 = vld [vmem:[#allocation4 + $0x168] sm:$0xff]
    %v70 = vld [vmem:[#allocation4 + $0x170] sm:$0xff]
    %v71 = vld [vmem:[#allocation4 + $0x178] sm:$0xff]
    %v72 = vld [vmem:[#allocation4 + $0x180] sm:$0x1]
    %v73 = vld [vmem:[#allocation4 + $0x190] sm:$0x1]
    %v74 = vld [vmem:[#allocation4 + $0x1a0] sm:$0x1]
    %v75 = vlaneseq
    %v76 = vshrl.u32 %v75, 7
    %v77 = vsub.s32 0, %v76
    %v78 = vrot.slane %v72, %v77
    %vm79 = vcmask 130048
    %v81 = vsel %vm79, %v37, 0
    %83 = vmatprep.subr.mxu0 0.0
    %84 = vmatpush1.msra.mxu0 0.0
    %85 = vmatprep.subr.mxu0 0.0
    %86 = vmatpush1.msra.mxu0 0.0
    %87 = vmatprep.subr.mxu0 0.0
    %88 = vmatpush1.msra.mxu0 0.0
    %89 = vmatprep.subr.mxu0 0.0
    %90 = vmatpush1.msra.mxu0 0.0
    %91 = vmatprep.subr.mxu0 0.0
    %92 = vmatpush1.msra.mxu0 0.0
    %93 = vmatprep.subr.mxu0 0.0
    %94 = vmatpush1.msra.mxu0 0.0
    %95 = vmatprep.subr.mxu0 0.0
    %96 = vmatpush1.msra.mxu0 0.0
    %97 = vmatprep.subr.mxu0 0.0
    %98 = vmatpush1.msra.mxu0 0.0
    %99 = vmatprep.subr.mxu0 0.0
    %100 = vmatpush1.msra.mxu0 0.0
    %101 = vmatprep.subr.mxu0 0.0
    %102 = vmatpush1.msra.mxu0 0.0
    %103 = vmatprep.subr.mxu0 0.0
    %104 = vmatpush1.msra.mxu0 0.0
    %105 = vmatprep.subr.mxu0 0.0
    %106 = vmatpush1.msra.mxu0 0.0
    %107 = vmatprep.subr.mxu0 0.0
    %108 = vmatpush1.msra.mxu0 0.0
    %109 = vmatprep.subr.mxu0 0.0
    %110 = vmatpush1.msra.mxu0 0.0
    %111 = vmatprep.subr.mxu0 0.0
    %112 = vmatpush1.msra.mxu0 %v39
    %113 = vmatprep.subr.mxu0 0.0
    %114 = vmatpush1.msra.mxu0 %v38
    %115 = vmatprep.subr.mxu0 0.0
    %116 = vmatpush2.msra.mxu0 0.0
    %117 = vmatprep.subr.mxu0 0.0
    %118 = vmatpush2.msra.mxu0 0.0
    %119 = vmatprep.subr.mxu0 0.0
    %120 = vmatpush2.msra.mxu0 0.0
    %121 = vmatprep.subr.mxu0 0.0
    %122 = vmatpush2.msra.mxu0 0.0
    %123 = vmatprep.subr.mxu0 0.0
    %124 = vmatpush2.msra.mxu0 0.0
    %125 = vmatprep.subr.mxu0 0.0
    %126 = vmatpush2.msra.mxu0 0.0
    %127 = vmatprep.subr.mxu0 0.0
    %128 = vmatpush2.msra.mxu0 0.0
    %129 = vmatprep.subr.mxu0 0.0
    %130 = vmatpush2.msra.mxu0 0.0
    %131 = vmatprep.subr.mxu0 0.0
    %132 = vmatpush2.msra.mxu0 0.0
    %133 = vmatprep.subr.mxu0 0.0
    %134 = vmatpush2.msra.mxu0 0.0
    %135 = vmatprep.subr.mxu0 0.0
    %136 = vmatpush2.msra.mxu0 0.0
    %137 = vmatprep.subr.mxu0 0.0
    %138 = vmatpush2.msra.mxu0 0.0
    %139 = vmatprep.subr.mxu0 0.0
    %140 = vmatpush2.msra.mxu0 0.0
    %141 = vmatprep.subr.mxu0 0.0
    %142 = vmatpush2.msra.mxu0 0.0
    %143 = vmatprep.subr.mxu0 0.0
    %144 = vmatpush2.msra.mxu0 0.0
    %145 = vmatprep.subr.mxu0 0.0
    %146 = vmatpush2.msra.mxu0 0.0
    %147 = vmatprep.mubr.f32.mxu0 0.0
    %148 = vmatmul.mubr.f32.gmra.mxu0 %v81
    %v149 = vpop.f32.mrf.mxu0
    %v150 = vadd.f32 %v78, %v149
    %v151 = vpop.f32.mrf.mxu0
    %152 = vdwg.mxu0
    %v153 = vtanh.pop %v150
    %v154 = vlaneseq
    %v155 = vshrl.u32 %v154, 7
    %v156 = vsub.s32 0, %v155
    %v157 = vrot.slane %v73, %v156
    %158 = vmatprep.subr.mxu0 0.0
    %159 = vmatpush1.msra.mxu0 %v55
    %160 = vmatprep.subr.mxu0 0.0
    %161 = vmatpush1.msra.mxu0 %v54
    %162 = vmatprep.subr.mxu0 0.0
    %163 = vmatpush1.msra.mxu0 %v53
    %164 = vmatprep.subr.mxu0 0.0
    %165 = vmatpush1.msra.mxu0 %v52
    %166 = vmatprep.subr.mxu0 0.0
    %167 = vmatpush1.msra.mxu0 %v51
    %168 = vmatprep.subr.mxu0 0.0
    %169 = vmatpush1.msra.mxu0 %v50
    %170 = vmatprep.subr.mxu0 0.0
    %171 = vmatpush1.msra.mxu0 %v49
    %172 = vmatprep.subr.mxu0 0.0
    %173 = vmatpush1.msra.mxu0 %v48
    %174 = vmatprep.subr.mxu0 0.0
    %175 = vmatpush1.msra.mxu0 %v47
    %176 = vmatprep.subr.mxu0 0.0
    %177 = vmatpush1.msra.mxu0 %v46
    %178 = vmatprep.subr.mxu0 0.0
    %179 = vmatpush1.msra.mxu0 %v45
    %180 = vmatprep.subr.mxu0 0.0
    %181 = vmatpush1.msra.mxu0 %v44
    %182 = vmatprep.subr.mxu0 0.0
    %183 = vmatpush1.msra.mxu0 %v43
    %184 = vmatprep.subr.mxu0 0.0
    %185 = vmatpush1.msra.mxu0 %v42
    %186 = vmatprep.subr.mxu0 0.0
    %187 = vmatpush1.msra.mxu0 %v41
    %188 = vmatprep.subr.mxu0 0.0
    %189 = vmatpush1.msra.mxu0 %v40
    %190 = vmatprep.subr.mxu0 0.0
    %191 = vmatpush2.msra.mxu0 0.0
    %192 = vmatprep.subr.mxu0 0.0
    %193 = vmatpush2.msra.mxu0 0.0
    %194 = vmatprep.subr.mxu0 0.0
    %195 = vmatpush2.msra.mxu0 0.0
    %196 = vmatprep.subr.mxu0 0.0
    %197 = vmatpush2.msra.mxu0 0.0
    %198 = vmatprep.subr.mxu0 0.0
    %199 = vmatpush2.msra.mxu0 0.0
    %200 = vmatprep.subr.mxu0 0.0
    %201 = vmatpush2.msra.mxu0 0.0
    %202 = vmatprep.subr.mxu0 0.0
    %203 = vmatpush2.msra.mxu0 0.0
    %204 = vmatprep.subr.mxu0 0.0
    %205 = vmatpush2.msra.mxu0 0.0
    %206 = vmatprep.subr.mxu0 0.0
    %207 = vmatpush2.msra.mxu0 0.0
    %208 = vmatprep.subr.mxu0 0.0
    %209 = vmatpush2.msra.mxu0 0.0
    %210 = vmatprep.subr.mxu0 0.0
    %211 = vmatpush2.msra.mxu0 0.0
    %212 = vmatprep.subr.mxu0 0.0
    %213 = vmatpush2.msra.mxu0 0.0
    %214 = vmatprep.subr.mxu0 0.0
    %215 = vmatpush2.msra.mxu0 0.0
    %216 = vmatprep.subr.mxu0 0.0
    %217 = vmatpush2.msra.mxu0 0.0
    %218 = vmatprep.subr.mxu0 0.0
    %219 = vmatpush2.msra.mxu0 0.0
    %220 = vmatprep.subr.mxu0 0.0
    %221 = vmatpush2.msra.mxu0 0.0
    %222 = vmatprep.mubr.f32.mxu0 0.0
    %223 = vmatmul.mubr.f32.gmra.mxu0 %v153
    %v224 = vpop.f32.mrf.mxu0
    %v225 = vadd.f32 %v157, %v224
    %v226 = vpop.f32.mrf.mxu0
    %227 = vdwg.mxu0
    %v228 = vtanh.pop %v225
    %v229 = vlaneseq
    %v230 = vshrl.u32 %v229, 7
    %v231 = vsub.s32 0, %v230
    %v232 = vrot.slane %v74, %v231
    %233 = vmatprep.subr.mxu0 0.0
    %234 = vmatpush1.msra.mxu0 %v71
    %235 = vmatprep.subr.mxu0 0.0
    %236 = vmatpush1.msra.mxu0 %v70
    %237 = vmatprep.subr.mxu0 0.0
    %238 = vmatpush1.msra.mxu0 %v69
    %239 = vmatprep.subr.mxu0 0.0
    %240 = vmatpush1.msra.mxu0 %v68
    %241 = vmatprep.subr.mxu0 0.0
    %242 = vmatpush1.msra.mxu0 %v67
    %243 = vmatprep.subr.mxu0 0.0
    %244 = vmatpush1.msra.mxu0 %v66
    %245 = vmatprep.subr.mxu0 0.0
    %246 = vmatpush1.msra.mxu0 %v65
    %247 = vmatprep.subr.mxu0 0.0
    %248 = vmatpush1.msra.mxu0 %v64
    %249 = vmatprep.subr.mxu0 0.0
    %250 = vmatpush1.msra.mxu0 %v63
    %251 = vmatprep.subr.mxu0 0.0
    %252 = vmatpush1.msra.mxu0 %v62
    %253 = vmatprep.subr.mxu0 0.0
    %254 = vmatpush1.msra.mxu0 %v61
    %255 = vmatprep.subr.mxu0 0.0
    %256 = vmatpush1.msra.mxu0 %v60
    %257 = vmatprep.subr.mxu0 0.0
    %258 = vmatpush1.msra.mxu0 %v59
    %259 = vmatprep.subr.mxu0 0.0
    %260 = vmatpush1.msra.mxu0 %v58
    %261 = vmatprep.subr.mxu0 0.0
    %262 = vmatpush1.msra.mxu0 %v57
    %263 = vmatprep.subr.mxu0 0.0
    %264 = vmatpush1.msra.mxu0 %v56
    %265 = vmatprep.subr.mxu0 0.0
    %266 = vmatpush2.msra.mxu0 0.0
    %267 = vmatprep.subr.mxu0 0.0
    %268 = vmatpush2.msra.mxu0 0.0
    %269 = vmatprep.subr.mxu0 0.0
    %270 = vmatpush2.msra.mxu0 0.0
    %271 = vmatprep.subr.mxu0 0.0
    %272 = vmatpush2.msra.mxu0 0.0
    %273 = vmatprep.subr.mxu0 0.0
    %274 = vmatpush2.msra.mxu0 0.0
    %275 = vmatprep.subr.mxu0 0.0
    %276 = vmatpush2.msra.mxu0 0.0
    %277 = vmatprep.subr.mxu0 0.0
    %278 = vmatpush2.msra.mxu0 0.0
    %279 = vmatprep.subr.mxu0 0.0
    %280 = vmatpush2.msra.mxu0 0.0
    %281 = vmatprep.subr.mxu0 0.0
    %282 = vmatpush2.msra.mxu0 0.0
    %283 = vmatprep.subr.mxu0 0.0
    %284 = vmatpush2.msra.mxu0 0.0
    %285 = vmatprep.subr.mxu0 0.0
    %286 = vmatpush2.msra.mxu0 0.0
    %287 = vmatprep.subr.mxu0 0.0
    %288 = vmatpush2.msra.mxu0 0.0
    %289 = vmatprep.subr.mxu0 0.0
    %290 = vmatpush2.msra.mxu0 0.0
    %291 = vmatprep.subr.mxu0 0.0
    %292 = vmatpush2.msra.mxu0 0.0
    %293 = vmatprep.subr.mxu0 0.0
    %294 = vmatpush2.msra.mxu0 0.0
    %295 = vmatprep.subr.mxu0 0.0
    %296 = vmatpush2.msra.mxu0 0.0
    %297 = vmatprep.mubr.f32.mxu0 0.0
    %298 = vmatmul.mubr.f32.gmra.mxu0 %v228
    %v299 = vpop.f32.mrf.mxu0
    %v300 = vadd.f32 %v232, %v299
    %v301 = vpop.f32.mrf.mxu0
    %302 = vdwg.mxu0
    %v303 = vtanh.pop %v300
    %vm304 = vcmask 31744
    %305 = vst.msk [vmem:[%s2] sm:$0xff] %vm304, %v303
    // Predicated region
    $region18: #{tpu_custom_call.1} parent=1 // pred_check
      _
    $region19: #{tpu_custom_call.1} parent=1 // pred_check_branch
      %307 = sbr.rel (0) target = $region21
    $region20: #{tpu_custom_call.1} parent=1 // pred_region
      _
    $region21: #{tpu_custom_call.1} parent=1 // pred_fallthru
      _
    // Predicated region
    $region22: #{tpu_custom_call.1} parent=1 // pred_check
      _
    $region23: #{tpu_custom_call.1} parent=1 // pred_check_branch
      %309 = sbr.rel (0) target = $region25
    $region24: #{tpu_custom_call.1} parent=1 // pred_region
      _
    $region25: #{tpu_custom_call.1} parent=1 // pred_fallthru
      _
    %310 = vsyncpa [#allocation3], 1
    %311 = vsyncpa [#allocation5], 1

</llo_original>
